<compile_context>
chip_gen: v7x
topology: tpu7x:2x2x1
jax: 0.10.0
libtpu: 0.0.40
codegen_flags: <defaults>
</compile_context>

<pallas_src>
import jax
import jax.numpy as jnp
from jax import lax
from jax.experimental import pallas as pl
from jax.experimental.pallas import tpu as pltpu


def _l2norm_kernel(scale_ref, x_ref, o_ref):
    # scale_ref: (C, 1); x_ref/o_ref: (1, C, T) block (one batch elem, one
    # spatial tile).  Reduction over C stays fully inside the block.
    x = x_ref[0].astype(jnp.float32)                  # (C, T)
    s = scale_ref[...].astype(jnp.float32)            # (C, 1) -> broadcasts over T
    ssq = jnp.sum(x * x, axis=0, keepdims=True)       # (1, T) channel sum of squares (VPU)
    inv = lax.rsqrt(jnp.maximum(ssq, 1e-12))          # clamp(min=1e-12).rsqrt()  (EUP)
    o_ref[0] = (s * (x * inv)).astype(o_ref.dtype)


def _choose_spatial_tile(hw128, C, itemsize, target_block_bytes):
    """Largest 128-multiple tile T that evenly divides hw128 (no ragged tail /
    masked stores) while keeping one (C, T) block under target_block_bytes."""
    m = hw128 // 128
    best = 1
    for d in range(1, m + 1):
        if m % d == 0 and 128 * d * C * itemsize <= target_block_bytes:
            best = d
    return 128 * best


def l2norm(x, scale, *, target_block_bytes=2 * 1024 * 1024):
    """x: (N, C, H, W) NCHW, scale: (1, C, 1, 1). Returns (N, C, H, W)."""
    N, C, H, W = x.shape
    hw = H * W
    itemsize = jnp.dtype(x.dtype).itemsize

    # Pad flattened spatial axis to a multiple of 128 so all stores are
    # lane-dense, unmasked vst's.
    hw128 = ((hw + 127) // 128) * 128
    x_flat = x.reshape(N, C, hw)
    if hw128 != hw:
        x_flat = jnp.pad(x_flat, ((0, 0), (0, 0), (0, hw128 - hw)))

    T = _choose_spatial_tile(hw128, C, itemsize, target_block_bytes)
    n_hw = hw128 // T

    # NOTE: for small / non-multiple-of-8 C (like the C=4 smoke test) the
    # (C, T) sublane layout wastes part of each vreg; the SSD production case
    # (C=512) is fully dense.  For the realistic C this is the right layout.
    s_flat = scale.reshape(C, 1)

    out = pl.pallas_call(
        _l2norm_kernel,
        out_shape=jax.ShapeDtypeStruct((N, C, hw128), x.dtype),
        grid=(N, n_hw),
        in_specs=[
            # scale: full (C, 1) block, identical for every grid step.
            pl.BlockSpec((C, 1), lambda n, j: (0, 0)),
            # x: one batch element x one lane-dense spatial tile per step.
            # (If DMA is still exposed in xprof, pipeline_mode=pl.Buffered(3)
            # on this spec is the next knob to sweep.)
            pl.BlockSpec((1, C, T), lambda n, j: (n, 0, j)),
        ],
        out_specs=pl.BlockSpec((1, C, T), lambda n, j: (n, 0, j)),
        compiler_params=pltpu.CompilerParams(
            dimension_semantics=("parallel", "parallel"),
        ),
    )(s_flat, x_flat)

    if hw128 != hw:
        out = out[:, :, :hw]
    return out.reshape(N, C, H, W)


def l2norm_ref(x, scale):
    ssq = jnp.sum(x.astype(jnp.float32) ** 2, axis=1, keepdims=True)
    inv = lax.rsqrt(jnp.maximum(ssq, 1e-12))
    return (scale.astype(jnp.float32) * x.astype(jnp.float32) * inv).astype(x.dtype)


if __name__ == "__main__":
    key = jax.random.PRNGKey(0)

    # --- Small smoke test matching the module defaults scaled down ---
    N, C, H, W = 2, 4, 16, 16
    x = jax.random.normal(key, (N, C, H, W), dtype=jnp.float32)
    # Deterministic parameter init, matching nn.Parameter([scale]*chan_num).view(1,C,1,1)
    scale = jnp.full((1, C, 1, 1), 20.0, dtype=jnp.float32)

    out = l2norm(x, scale)
    jax.block_until_ready(out)
    ref = l2norm_ref(x, scale)
    assert out.shape == (N, C, H, W)
    assert jnp.allclose(out, ref, rtol=1e-5, atol=1e-5)

    # --- Realistic-channel case exercising bf16 input and the 128-padding path ---
    N2, C2, H2, W2 = 1, 512, 19, 19          # hw = 361 -> padded to 384
    key2 = jax.random.PRNGKey(0)
    x2 = jax.random.normal(key2, (N2, C2, H2, W2), dtype=jnp.bfloat16)
    scale2 = jnp.full((1, C2, 1, 1), 20.0, dtype=jnp.bfloat16)

    out2 = l2norm(x2, scale2)
    jax.block_until_ready(out2)
    ref2 = l2norm_ref(x2, scale2)
    assert out2.shape == (N2, C2, H2, W2)
    assert jnp.allclose(out2.astype(jnp.float32), ref2.astype(jnp.float32),
                        rtol=2e-2, atol=2e-2)

    print("KERNEL_OK")
</pallas_src>

<mosaic_0001>
module attributes {stable_mosaic.version = 11 : i64} {
  func.func @_l2norm_kernel(%arg0: i32, %arg1: i32, %arg2: memref<4x1xf32, #tpu.memory_space<vmem>>, %arg3: memref<1x4x256xf32, #tpu.memory_space<vmem>>, %arg4: memref<1x4x256xf32, #tpu.memory_space<vmem>>) attributes {dimension_semantics = [#tpu.dimension_semantics<parallel>, #tpu.dimension_semantics<parallel>], iteration_bounds = array<i64: 2, 1>, scalar_prefetch = 0 : i64, scratch_operands = 0 : i64, tpu.core_type = #tpu.core_type<tc>, window_params = [{pipeline_mode = #tpu.pipeline_mode<synchronous>, transform_indices = @transform_0, window_bounds = array<i64: 4, 1>}, {transform_indices = @transform_1, window_bounds = array<i64: 1, 4, 256>}, {transform_indices = @transform_2, window_bounds = array<i64: 1, 4, 256>}]} {
    %c0 = arith.constant 0 : index
    %c0_0 = arith.constant 0 : index
    %c0_1 = arith.constant 0 : index
    %0 = vector.load %arg3[%c0, %c0_0, %c0_1] : memref<1x4x256xf32, #tpu.memory_space<vmem>>, vector<1x4x256xf32>
    %1 = vector.shape_cast %0 : vector<1x4x256xf32> to vector<4x256xf32>
    %c0_2 = arith.constant 0 : index
    %c0_3 = arith.constant 0 : index
    %2 = vector.load %arg2[%c0_2, %c0_3] : memref<4x1xf32, #tpu.memory_space<vmem>>, vector<4x1xf32>
    %3 = arith.mulf %1, %1 : vector<4x256xf32>
    %cst = arith.constant dense<0.000000e+00> : vector<256xf32>
    %4 = vector.multi_reduction <add>, %3, %cst [0] : vector<4x256xf32> to vector<256xf32>
    %5 = vector.shape_cast %4 : vector<256xf32> to vector<1x256xf32>
    %cst_4 = arith.constant 9.99999996E-13 : f32
    %6 = vector.broadcast %cst_4 : f32 to vector<1x256xf32>
    %7 = arith.maximumf %5, %6 : vector<1x256xf32>
    %8 = math.rsqrt %7 : vector<1x256xf32>
    %9 = vector.broadcast %8 : vector<1x256xf32> to vector<4x256xf32>
    %10 = arith.mulf %1, %9 : vector<4x256xf32>
    %11 = vector.broadcast %2 : vector<4x1xf32> to vector<4x256xf32>
    %12 = arith.mulf %11, %10 : vector<4x256xf32>
    %c0_5 = arith.constant 0 : index
    %c0_6 = arith.constant 0 : index
    %c0_7 = arith.constant 0 : index
    %13 = vector.load %arg4[%c0_5, %c0_6, %c0_7] : memref<1x4x256xf32, #tpu.memory_space<vmem>>, vector<1x4x256xf32>
    %14 = vector.shape_cast %13 : vector<1x4x256xf32> to vector<4x256xf32>
    %15 = vector.shape_cast %12 : vector<4x256xf32> to vector<1x4x256xf32>
    tpu.vector_store %arg4[%c0_5, %c0_6, %c0_7], %15 {strides = array<i32>} : memref<1x4x256xf32, #tpu.memory_space<vmem>>, vector<1x4x256xf32>,
    return
  }
  func.func @transform_0(%arg0: i32, %arg1: i32) -> (i32, i32) {
    %c0_i32 = arith.constant 0 : i32
    %c0_i32_0 = arith.constant 0 : i32
    %c0_i32_1 = arith.constant 0 : i32
    return %c0_i32, %c0_i32_0 : i32, i32
  }
  func.func @transform_1(%arg0: i32, %arg1: i32) -> (i32, i32, i32) {
    %c0_i32 = arith.constant 0 : i32
    %c0_i32_0 = arith.constant 0 : i32
    return %arg0, %c0_i32, %arg1 : i32, i32, i32
  }
  func.func @transform_2(%arg0: i32, %arg1: i32) -> (i32, i32, i32) {
    %c0_i32 = arith.constant 0 : i32
    %c0_i32_0 = arith.constant 0 : i32
    return %arg0, %c0_i32, %arg1 : i32, i32, i32
  }
}

</mosaic_0001>

<llo_original>
// kernel: tpu_custom_call.1
$region0: #{tpu_custom_call.1}
  #allocation0 [shape = 'u32[]', space=smem, size = 0x4, offset = 0x4, fixed_abs, tag = 'smem constant byte address 0x4 - core index']
  #allocation1 [shape = 'u32[144,128]{1,0:T(1,128)}', space=vmem, size = 0x12000, scoped, tag = 'internal scratch']
  %s0 = inlined_call_operand.vmem [shape: f32[4,1], index: 0, kind: input, shape index: {}]
  %s1 = inlined_call_operand.hbm [shape: f32[2,4,256], index: 1, kind: input, shape index: {}]
  %s2 = inlined_call_operand.hbm [shape: f32[2,4,256], index: 2, kind: output, shape index: {}]
  %s3 = sld [smem:[#allocation0]]
  $region45: #{tpu_custom_call.1} parent=0
    _
  %s5 = ssub.s32 1, %s3
  %s6 = scalar_select 0, %s5, %s3
  $region1: #{tpu_custom_call.1} parent=0
    #allocation2 [shape = 'u8[8192]{0}', space=vmem, size = 0x2000, scoped, tag = 'input window, operand 1']
    #allocation3 [shape = 's32[2]{0}', space=sflag, size = 0x8, scoped, tag = 'scoped memory for tpu_custom_call.1']
    #allocation4 [shape = 's32[2]{0}', space=sflag, size = 0x8, scoped, tag = 'scoped memory for tpu_custom_call.1']
    #allocation5 [shape = 'u8[8192]{0}', space=vmem, size = 0x2000, scoped, tag = 'output window, operand 0']
    %7 = vsyncpa [#allocation3], 0
    %s8 = scalar_lea.sflag [#allocation3], 1
    %9 = vsyncpa %s8, 0
    %10 = vsyncpa [#allocation4], 0
    %s11 = scalar_lea.sflag [#allocation4], 1
    %12 = vsyncpa %s11, 0
    loop: start=0, step=1, limit=4
    $region2: #{tpu_custom_call.1} parent=1 // loop_pre_header
      _
    $region3: #{tpu_custom_call.1} parent=1 // loop_header
      %s14 = sphi 0, %s18
      %p15 = scmp.ge.s32.totalorder %s14, 4
      %s21 = sphi 0, %s33
      %s22 = sphi 0, %s29
      %s23 = sphi 0, %s21
      %s24 = sphi 0, %s22
      %s25 = sphi 0, %s23
      %s26 = sphi 0, %s24
      %s34 = sphi 0, %s34
      %s36 = sphi 0, %s34
      %s37 = sphi 0, %s36
      %s51 = sphi 0, %s37
      %s59 = sphi 0, %s61
      %s62 = sphi 0, %s59
      %s63 = sphi 0, %s62
      %s79 = sphi 0, %s63
      %s87 = sphi 0, %s89
      %s90 = sphi 0, %s87
      %s91 = sphi 0, %s90
      %s107 = sphi 0, %s91
    $region4: #{tpu_custom_call.1} parent=1 // loop_header_branch
      %17 = sbr.rel (%p15) target = $region8
    $region5: #{tpu_custom_call.1} parent=1 // loop_body
      %s19 = ssub.s32 %s14, 1
      %s20 = ssub.s32 %s14, 2
      %s27 = sadd.s32 1, %s22
      %p28 = scmp.ge.s32.totalorder %s27, 1
      %s29 = scalar_select %p28, 0, %s27
      %s30 = sadd.s32 1, %s21
      %s31 = scalar_select %p28, %s30, %s21
      %p32 = scmp.ge.s32.totalorder %s31, 2
      %s33 = scalar_select %p32, 0, %s31
      %s35 = sadd.s32 %s34, 1
      %p38 = scmp.eq.s32.totalorder %s14, 1
      %p39 = scmp.ne.s32.totalorder %s34, %s36
      %p40 = scmp.eq.s32.totalorder %s14, 0
      %p41 = por %p39, %p40
      %p42 = scmp.ne.s32.totalorder %s34, %s36
      %p43 = scmp.eq.s32.totalorder %s19, 1
      %p44 = por %p42, %p43
      %p45 = scmp.ne.s32.totalorder %s36, %s37
      %p46 = scmp.eq.s32.totalorder %s19, 0
      %p47 = por %p45, %p46
      %p48 = scmp.ne.s32.totalorder %s36, %s37
      %p49 = scmp.eq.s32.totalorder %s20, 1
      %p50 = por %p48, %p49
      %p52 = scmp.ne.s32.totalorder %s37, %s51
      %p53 = scmp.eq.s32.totalorder %s20, 0
      %p54 = por %p52, %p53
      %s55 = ssub.s32 %s21, %s33
      %s56 = ssub.s32 %s22, %s29
      %s57 = sor.u32 %s55, %s56
      %p58 = scmp.eq.s32.totalorder %s57, 0
      %s60 = sadd.s32 %s59, 1
      %s61 = scalar_select %p58, %s59, %s60
      %p64 = pneg %p58
      %p65 = scmp.eq.s32.totalorder %s14, 1
      %p66 = por %p64, %p65
      %p67 = scmp.ne.s32.totalorder %s59, %s62
      %p68 = scmp.eq.s32.totalorder %s14, 0
      %p69 = por %p67, %p68
      %p70 = scmp.ne.s32.totalorder %s59, %s62
      %p71 = scmp.eq.s32.totalorder %s19, 1
      %p72 = por %p70, %p71
      %p73 = scmp.ne.s32.totalorder %s62, %s63
      %p74 = scmp.eq.s32.totalorder %s19, 0
      %p75 = por %p73, %p74
      %p76 = scmp.ne.s32.totalorder %s62, %s63
      %p77 = scmp.eq.s32.totalorder %s20, 1
      %p78 = por %p76, %p77
      %p80 = scmp.ne.s32.totalorder %s63, %s79
      %p81 = scmp.eq.s32.totalorder %s20, 0
      %p82 = por %p80, %p81
      %s83 = ssub.s32 %s21, %s33
      %s84 = ssub.s32 %s22, %s29
      %s85 = sor.u32 %s83, %s84
      %p86 = scmp.eq.s32.totalorder %s85, 0
      %s88 = sadd.s32 %s87, 1
      %s89 = scalar_select %p86, %s87, %s88
      %p92 = pneg %p86
      %p93 = scmp.eq.s32.totalorder %s14, 1
      %p94 = por %p92, %p93
      %p95 = scmp.ne.s32.totalorder %s87, %s90
      %p96 = scmp.eq.s32.totalorder %s14, 0
      %p97 = por %p95, %p96
      %p98 = scmp.ne.s32.totalorder %s87, %s90
      %p99 = scmp.eq.s32.totalorder %s19, 1
      %p100 = por %p98, %p99
      %p101 = scmp.ne.s32.totalorder %s90, %s91
      %p102 = scmp.eq.s32.totalorder %s19, 0
      %p103 = por %p101, %p102
      %p104 = scmp.ne.s32.totalorder %s90, %s91
      %p105 = scmp.eq.s32.totalorder %s20, 1
      %p106 = por %p104, %p105
      %p108 = scmp.ne.s32.totalorder %s91, %s107
      %p109 = scmp.eq.s32.totalorder %s20, 0
      %p110 = por %p108, %p109
      %p111 = scmp.le.s32.totalorder 1, %s14
      %p112 = scmp.lt.s32.totalorder %s14, 3
      %p113 = pnand %p111, %p112
      %p114 = pneg %p113
      // Predicated region
      $region9: #{tpu_custom_call.1} parent=5 // pred_check
        _
      $region10: #{tpu_custom_call.1} parent=5 // pred_check_branch
        %116 = sbr.rel (%p113) target = $region12
      $region11: #{tpu_custom_call.1} parent=5 // pred_region
        %s117 = ssub.s32 %s14, 1
        // Predicated region
        $region13: #{tpu_custom_call.1} parent=11 // pred_check
          %p118 = pneg %p47
        $region14: #{tpu_custom_call.1} parent=11 // pred_check_branch
          %120 = sbr.rel (%p118) target = $region16
        $region15: #{tpu_custom_call.1} parent=11 // pred_region
          _
        $region16: #{tpu_custom_call.1} parent=11 // pred_fallthru
          _
      $region12: #{tpu_custom_call.1} parent=5 // pred_fallthru
        _
      %p121 = scmp.lt.s32.totalorder %s14, 2
      // Predicated region
      $region17: #{tpu_custom_call.1} parent=5 // pred_check
        %p122 = pneg %p121
      $region18: #{tpu_custom_call.1} parent=5 // pred_check_branch
        %124 = sbr.rel (%p122) target = $region20
      $region19: #{tpu_custom_call.1} parent=5 // pred_region
        // Predicated region
        $region21: #{tpu_custom_call.1} parent=19 // pred_check
          %p125 = pneg %p69
        $region22: #{tpu_custom_call.1} parent=19 // pred_check_branch
          %127 = sbr.rel (%p125) target = $region24
        $region23: #{tpu_custom_call.1} parent=19 // pred_region
          %s128 = sand.u32 %s59, 1
          %s129 = scalar_lea.sflag [#allocation3], %s128
          %s130 = sand.u32 %s59, 1
          %s131 = smul.addr %s130, 8
          %s132 = scalar_lea.vmem [#allocation2], %s131
          %s133 = smul.u32 2, %s22
          %s135 = ssub.s32 128, 128
          %136 = vsyncadd %s129, %s135
          %s137 = smul.addr %s21, 2
          %s138 = sadd.s32 %s133, %s137
          %s139 = smul.addr %s138, 64
          %s140 = scalar_lea.hbm %s1, %s139
          %s142 = sshll.u32 %s132, 4
          %s143 = int_to_ptr.vmem [resolvable:$true] %s142
          %145 = dma.hbm_to_vmem [thread:$0]  %s140, 128, %s143, %s129
        $region24: #{tpu_custom_call.1} parent=19 // pred_fallthru
          _
      $region20: #{tpu_custom_call.1} parent=5 // pred_fallthru
        _
      %p146 = scmp.le.s32.totalorder 1, %s14
      %p147 = scmp.lt.s32.totalorder %s14, 3
      %p148 = pnand %p146, %p147
      %p149 = pneg %p148
      // Predicated region
      $region25: #{tpu_custom_call.1} parent=5 // pred_check
        _
      $region26: #{tpu_custom_call.1} parent=5 // pred_check_branch
        %151 = sbr.rel (%p148) target = $region28
      $region27: #{tpu_custom_call.1} parent=5 // pred_region
        %s152 = ssub.s32 %s14, 1
        %s153 = sand.u32 %s62, 1
        %s154 = scalar_lea.sflag [#allocation3], %s153
        %s155 = sand.u32 %s62, 1
        %s156 = smul.addr %s155, 8
        %s157 = scalar_lea.vmem [#allocation2], %s156
        // Predicated region
        $region29: #{tpu_custom_call.1} parent=27 // pred_check
          %p158 = pneg %p75
        $region30: #{tpu_custom_call.1} parent=27 // pred_check_branch
          %160 = sbr.rel (%p158) target = $region32
        $region31: #{tpu_custom_call.1} parent=27 // pred_region
          %161 = dma.done %s154, 128
        $region32: #{tpu_custom_call.1} parent=27 // pred_fallthru
          _
        %p162 = pneg %p47
        %p163 = pneg %p44
        %s164 = sand.u32 %s62, 1
        %s165 = scalar_lea.sflag [#allocation3], %s164
        %s166 = sand.u32 %s62, 1
        %s167 = smul.addr %s166, 8
        %s168 = scalar_lea.vmem [#allocation2], %s167
        %p169 = pneg %p75
        %p170 = pneg %p72
        %p171 = pneg %p103
        %p172 = pneg %p100
        %s173 = sand.u32 %s90, 1
        %s174 = scalar_lea.sflag [#allocation4], %s173
        %s175 = sand.u32 %s90, 1
        %s176 = smul.addr %s175, 8
        %s177 = scalar_lea.vmem [#allocation5], %s176
        %s178 = smul.u32 2, %s24
        %s179 = smul.u32 2, %s24
        %v180 = vld [vmem:[%s157] sm:$0xff]
        %v181 = vld [vmem:[%s0] sm:$0xf]
        %v182 = vmul.f32 %v180, %v180
        %v184 = vcombine.high %v182, %v182
        %vm186 = vcmask 1043456
        %v187 = vsel %vm186, %v182, 0.0
        %v188 = vrot.slane %v187, 4
        %v189 = vadd.f32 %v187, %v188
        %v190 = vrot.slane %v189, 2
        %v191 = vadd.f32 %v189, %v190
        %v192 = vrot.slane %v191, 1
        %v193 = vadd.f32 %v191, %v192
        %v194 = vsel %vm186, %v184, 0.0
        %v195 = vrot.slane %v194, 4
        %v196 = vadd.f32 %v194, %v195
        %v197 = vrot.slane %v196, 2
        %v198 = vadd.f32 %v196, %v197
        %v199 = vrot.slane %v198, 1
        %v200 = vadd.f32 %v198, %v199
        %v201 = vmax.f32 %v193, 1e-12
        %v202 = vmax.f32 %v200, 1e-12
        %v203 = vrsqrt.pop %v201
        %v204 = vrsqrt.pop %v202
        %v207 = vcombine.low %v203, %v204
        %v209 = vmul.f32 %v180, %v207
        %211 = vset.pattern.permute.xlu0 0
        %212 = vperm.xlu0 %211, %v181
        %v213 = vpop.permute.xlu0 %212
        %v216 = vcombine.high %v209, %v209
        %v218 = vmul.f32 %v213, %v209
        %v219 = vmul.f32 %v213, %v216
        %v222 = vcombine.low %v218, %v219
        %224 = vst [vmem:[%s177] sm:$0xff] %v222
        %s225 = sand.u32 %s90, 1
        %s226 = scalar_lea.sflag [#allocation4], %s225
        %s227 = sand.u32 %s90, 1
        %s228 = smul.addr %s227, 8
        %s229 = scalar_lea.vmem [#allocation5], %s228
        // Predicated region
        $region33: #{tpu_custom_call.1} parent=27 // pred_check
          %p230 = pneg %p100
        $region34: #{tpu_custom_call.1} parent=27 // pred_check_branch
          %232 = sbr.rel (%p230) target = $region36
        $region35: #{tpu_custom_call.1} parent=27 // pred_region
          %s233 = smul.u32 2, %s24
          %s235 = ssub.s32 128, 128
          %236 = vsyncadd %s226, %s235
          %s237 = smul.addr %s23, 2
          %s238 = sadd.s32 %s233, %s237
          %s239 = smul.addr %s238, 64
          %s240 = scalar_lea.hbm %s2, %s239
          %s242 = sshll.u32 %s229, 4
          %s243 = int_to_ptr.vmem [resolvable:$true] %s242
          %245 = dma.vmem_to_hbm [thread:$0]  %s243, 128, %s240, %s226
        $region36: #{tpu_custom_call.1} parent=27 // pred_fallthru
          _
      $region28: #{tpu_custom_call.1} parent=5 // pred_fallthru
        _
      %p246 = scmp.le.s32.totalorder 2, %s14
      // Predicated region
      $region37: #{tpu_custom_call.1} parent=5 // pred_check
        %p247 = pneg %p246
      $region38: #{tpu_custom_call.1} parent=5 // pred_check_branch
        %249 = sbr.rel (%p247) target = $region40
      $region39: #{tpu_custom_call.1} parent=5 // pred_region
        %s250 = ssub.s32 %s14, 2
        // Predicated region
        $region41: #{tpu_custom_call.1} parent=39 // pred_check
          %p251 = pneg %p106
        $region42: #{tpu_custom_call.1} parent=39 // pred_check_branch
          %253 = sbr.rel (%p251) target = $region44
        $region43: #{tpu_custom_call.1} parent=39 // pred_region
          %s254 = sand.u32 %s91, 1
          %s255 = scalar_lea.sflag [#allocation4], %s254
          %s256 = sand.u32 %s91, 1
          %s257 = smul.addr %s256, 8
          %s258 = scalar_lea.vmem [#allocation5], %s257
          %259 = dma.done %s255, 128
        $region44: #{tpu_custom_call.1} parent=39 // pred_fallthru
          _
      $region40: #{tpu_custom_call.1} parent=5 // pred_fallthru
        _
    $region6: #{tpu_custom_call.1} parent=1 // loop_footer
      %s18 = sadd.s32 1, %s14
    $region7: #{tpu_custom_call.1} parent=1 // loop_footer_branch
      %13 = sbr.rel target = $region3
    $region8: #{tpu_custom_call.1} parent=1 // loop_exit
      _
    %260 = vsyncpa [#allocation3], 1
    %s261 = scalar_lea.sflag [#allocation3], 1
    %262 = vsyncpa %s261, 1
    %263 = vsyncpa [#allocation4], 1
    %s264 = scalar_lea.sflag [#allocation4], 1
    %265 = vsyncpa %s264, 1

</llo_original>
